<compile_context>
chip_gen: v7x
topology: tpu7x:2x2x1
jax: 0.10.0
libtpu: 0.0.40
codegen_flags: <defaults>
</compile_context>

<pallas_src>
import functools
import jax
import jax.numpy as jnp
from jax.experimental import pallas as pl
from jax.experimental.pallas import tpu as pltpu


def _rnn_fused_kernel(xh_ref, wcat_ref, bcat_ref, wo_ref, bo_ref,
                      q_ref, hnew_ref):
    """Single-invocation kernel, all agents at once.

    xh   : (Na, B, I+H)   fused [x, h] operand, agent-major
    wcat : (Na, I+H, H)   fused, pre-transposed [W_ih; W_hh]
    bcat : (Na, 1, H)     b_ih + b_hh
    wo   : (Na, H, A_pad) pre-transposed, lane-padded output weights
    bo   : (Na, 1, A_pad) lane-padded output bias
    q    : (Na, B, A_pad)
    hnew : (Na, B, H)
    """
    xh = xh_ref[...]
    # One fused MXU pass per agent: (B, I+H) x (I+H, H), f32 accumulate.
    pre = jnp.einsum('abk,akh->abh', xh, wcat_ref[...],
                     preferred_element_type=jnp.float32) + bcat_ref[...]
    h_new = jnp.tanh(pre)
    hnew_ref[...] = h_new.astype(hnew_ref.dtype)

    # Grouped 1x1 conv == per-agent linear, lane-dense (A padded to 128) output.
    q = jnp.einsum('abh,aho->abo', h_new, wo_ref[...],
                   preferred_element_type=jnp.float32) + bo_ref[...]
    q_ref[...] = q.astype(q_ref.dtype)


@jax.jit
def rnn_forward(x, hidden, w_ih, w_hh, b_ih, b_hh, w_out, b_out):
    """
    x      : (batch, n_agents, *obs_shape, n_actions) -- trailing dims flatten
             to prod(obs_shape) * n_actions features
    hidden : (batch, n_agents, hidden_size)
    w_ih   : (n_agents, hidden_size, input_size)
    w_hh   : (n_agents, hidden_size, hidden_size)
    b_ih   : (n_agents, hidden_size)
    b_hh   : (n_agents, hidden_size)
    w_out  : (n_agents, n_actions, hidden_size)
    b_out  : (n_agents, n_actions)
    returns: q (batch, n_agents, n_actions), new_hidden (batch, n_agents, hidden_size)
    """
    n_agents, H, I = w_ih.shape
    A = w_out.shape[1]
    B = hidden.shape[0]
    A_pad = ((A + 127) // 128) * 128  # lane-dense q store

    # --- activation prep: fuse agent-major transpose with the feature concat
    # (single XLA fusion -> one HBM write of the (Na, B, I+H) operand). ---
    x2 = x.reshape(B, n_agents, I)
    xh = jnp.concatenate(
        [jnp.transpose(x2, (1, 0, 2)), jnp.transpose(hidden, (1, 0, 2))],
        axis=-1)                                                  # (Na, B, I+H)

    # --- static parameter prep (fused + pre-transposed + pre-added). ---
    w_cat = jnp.transpose(jnp.concatenate([w_ih, w_hh], axis=2),
                          (0, 2, 1))                              # (Na, I+H, H)
    b_cat = (b_ih + b_hh)[:, None, :]                             # (Na, 1, H)
    wo_t = jnp.transpose(w_out, (0, 2, 1))                        # (Na, H, A)
    wo_pad = jnp.pad(wo_t, ((0, 0), (0, 0), (0, A_pad - A)))      # (Na, H, A_pad)
    bo_pad = jnp.pad(b_out, ((0, 0), (0, A_pad - A)))[:, None, :]  # (Na, 1, A_pad)

    vmem_spec = pl.BlockSpec(memory_space=pltpu.MemorySpace.VMEM)
    q_pad, hnew_am = pl.pallas_call(
        _rnn_fused_kernel,
        out_shape=(
            jax.ShapeDtypeStruct((n_agents, B, A_pad), jnp.float32),
            jax.ShapeDtypeStruct((n_agents, B, H), jnp.float32),
        ),
        in_specs=[vmem_spec] * 5,
        out_specs=(vmem_spec, vmem_spec),
    )(xh, w_cat, b_cat, wo_pad, bo_pad)

    # Back to the PyTorch convention; slice off the lane padding.
    q = jnp.transpose(q_pad[:, :, :A], (1, 0, 2))      # (B, Na, A)
    new_hidden = jnp.transpose(hnew_am, (1, 0, 2))     # (B, Na, H)
    return q, new_hidden


def _reference(x, hidden, w_ih, w_hh, b_ih, b_hh, w_out, b_out):
    n_agents, H, I = w_ih.shape
    B = hidden.shape[0]
    x2 = x.reshape(B, n_agents, I)
    pre = (jnp.einsum('baj,ahj->bah', x2, w_ih)
           + jnp.einsum('bah,ahk->bak', hidden, jnp.swapaxes(w_hh, 1, 2))
           + b_ih[None] + b_hh[None])
    h_new = jnp.tanh(pre)
    q = jnp.einsum('bah,aoh->bao', h_new, w_out) + b_out[None]
    return q, h_new


if __name__ == "__main__":
    batch_size = 2
    n_agents = 3
    observation_shape = (4, 4)
    n_actions = 4
    hidden_size = 32
    input_size = 4 * 4 * n_actions  # prod(observation_shape) * n_actions = 64

    key = jax.random.PRNGKey(0)
    ks = jax.random.split(key, 8)
    bound = 1.0 / (hidden_size ** 0.5)

    # Deterministic synthetic parameters (PyTorch-style uniform init ranges).
    w_ih = jax.random.uniform(ks[0], (n_agents, hidden_size, input_size),
                              jnp.float32, -bound, bound)
    w_hh = jax.random.uniform(ks[1], (n_agents, hidden_size, hidden_size),
                              jnp.float32, -bound, bound)
    b_ih = jax.random.uniform(ks[2], (n_agents, hidden_size), jnp.float32, -bound, bound)
    b_hh = jax.random.uniform(ks[3], (n_agents, hidden_size), jnp.float32, -bound, bound)
    w_out = jax.random.uniform(ks[4], (n_agents, n_actions, hidden_size),
                               jnp.float32, -bound, bound)
    b_out = jax.random.uniform(ks[5], (n_agents, n_actions), jnp.float32, -bound, bound)

    # Input: batch x agents x *observation_shape x n_actions (flattens to
    # prod(observation_shape) * n_actions features, as the module's reshape needs).
    x = jax.random.normal(ks[6],
                          (batch_size, n_agents) + observation_shape + (n_actions,),
                          jnp.float32)
    hidden0 = jnp.zeros((batch_size, n_agents, hidden_size), jnp.float32)  # self.hidden

    q, new_hidden = rnn_forward(x, hidden0, w_ih, w_hh, b_ih, b_hh, w_out, b_out)
    jax.block_until_ready(q)
    jax.block_until_ready(new_hidden)

    q_ref, h_ref = _reference(x, hidden0, w_ih, w_hh, b_ih, b_hh, w_out, b_out)
    assert q.shape == (batch_size, n_agents, n_actions)
    assert new_hidden.shape == (batch_size, n_agents, hidden_size)
    assert jnp.allclose(q, q_ref, atol=2e-5, rtol=1e-5)
    assert jnp.allclose(new_hidden, h_ref, atol=2e-5, rtol=1e-5)

    print("KERNEL_OK")
</pallas_src>

<mosaic_0001>
module attributes {stable_mosaic.version = 11 : i64} {
  func.func @_rnn_fused_kernel(%arg0: memref<3x2x96xf32, #tpu.memory_space<vmem>>, %arg1: memref<3x96x32xf32, #tpu.memory_space<vmem>>, %arg2: memref<3x1x32xf32, #tpu.memory_space<vmem>>, %arg3: memref<3x32x128xf32, #tpu.memory_space<vmem>>, %arg4: memref<3x1x128xf32, #tpu.memory_space<vmem>>, %arg5: memref<3x2x128xf32, #tpu.memory_space<vmem>>, %arg6: memref<3x2x32xf32, #tpu.memory_space<vmem>>) attributes {dimension_semantics = [], scalar_prefetch = 0 : i64, scratch_operands = 0 : i64, tpu.core_type = #tpu.core_type<tc>} {
    %c0 = arith.constant 0 : index
    %c0_0 = arith.constant 0 : index
    %c0_1 = arith.constant 0 : index
    %0 = vector.load %arg0[%c0, %c0_0, %c0_1] : memref<3x2x96xf32, #tpu.memory_space<vmem>>, vector<3x2x96xf32>
    %c0_2 = arith.constant 0 : index
    %c0_3 = arith.constant 0 : index
    %c0_4 = arith.constant 0 : index
    %1 = vector.load %arg1[%c0_2, %c0_3, %c0_4] : memref<3x96x32xf32, #tpu.memory_space<vmem>>, vector<3x96x32xf32>
    "tpu.trace_start"() <{level = 10 : i32, message = "abk,akh->abh"}> : () -> ()
    %cst = arith.constant dense<0.000000e+00> : vector<3x2x32xf32>
    %2 = tpu.matmul %0, %1, %cst {dimension_numbers = #tpu.dot_dimension_numbers<[2], [1], [1], [2], [0, 0, 0, 1, 1, 2], [0], [0]>} : vector<3x2x96xf32>, vector<3x96x32xf32>, vector<3x2x32xf32> -> vector<3x2x32xf32>
    "tpu.trace_stop"() : () -> ()
    %c0_5 = arith.constant 0 : index
    %c0_6 = arith.constant 0 : index
    %c0_7 = arith.constant 0 : index
    %3 = vector.load %arg2[%c0_5, %c0_6, %c0_7] : memref<3x1x32xf32, #tpu.memory_space<vmem>>, vector<3x1x32xf32>
    %4 = vector.broadcast %3 : vector<3x1x32xf32> to vector<3x2x32xf32>
    %5 = arith.addf %2, %4 : vector<3x2x32xf32>
    %6 = math.tanh %5 : vector<3x2x32xf32>
    %c0_8 = arith.constant 0 : index
    %c0_9 = arith.constant 0 : index
    %c0_10 = arith.constant 0 : index
    %7 = vector.load %arg6[%c0_8, %c0_9, %c0_10] : memref<3x2x32xf32, #tpu.memory_space<vmem>>, vector<3x2x32xf32>
    tpu.vector_store %arg6[%c0_8, %c0_9, %c0_10], %6 {strides = array<i32>} : memref<3x2x32xf32, #tpu.memory_space<vmem>>, vector<3x2x32xf32>,
    %c0_11 = arith.constant 0 : index
    %c0_12 = arith.constant 0 : index
    %c0_13 = arith.constant 0 : index
    %8 = vector.load %arg3[%c0_11, %c0_12, %c0_13] : memref<3x32x128xf32, #tpu.memory_space<vmem>>, vector<3x32x128xf32>
    "tpu.trace_start"() <{level = 10 : i32, message = "abh,aho->abo"}> : () -> ()
    %cst_14 = arith.constant dense<0.000000e+00> : vector<3x2x128xf32>
    %9 = tpu.matmul %6, %8, %cst_14 {dimension_numbers = #tpu.dot_dimension_numbers<[2], [1], [1], [2], [0, 0, 0, 1, 1, 2], [0], [0]>} : vector<3x2x32xf32>, vector<3x32x128xf32>, vector<3x2x128xf32> -> vector<3x2x128xf32>
    "tpu.trace_stop"() : () -> ()
    %c0_15 = arith.constant 0 : index
    %c0_16 = arith.constant 0 : index
    %c0_17 = arith.constant 0 : index
    %10 = vector.load %arg4[%c0_15, %c0_16, %c0_17] : memref<3x1x128xf32, #tpu.memory_space<vmem>>, vector<3x1x128xf32>
    %11 = vector.broadcast %10 : vector<3x1x128xf32> to vector<3x2x128xf32>
    %12 = arith.addf %9, %11 : vector<3x2x128xf32>
    %c0_18 = arith.constant 0 : index
    %c0_19 = arith.constant 0 : index
    %c0_20 = arith.constant 0 : index
    %13 = vector.load %arg5[%c0_18, %c0_19, %c0_20] : memref<3x2x128xf32, #tpu.memory_space<vmem>>, vector<3x2x128xf32>
    tpu.vector_store %arg5[%c0_18, %c0_19, %c0_20], %12 {strides = array<i32>} : memref<3x2x128xf32, #tpu.memory_space<vmem>>, vector<3x2x128xf32>,
    return
  }
}

</mosaic_0001>

<llo_original>
// kernel: rnn_forward.1
$region0: #{rnn_forward.1}
  #allocation0 [shape = 'u32[]', space=smem, size = 0x4, offset = 0x4, fixed_abs, tag = 'smem constant byte address 0x4 - core index']
  #allocation1 [shape = 'u32[144,128]{1,0:T(1,128)}', space=vmem, size = 0x12000, scoped, tag = 'internal scratch']
  %s0 = inlined_call_operand.vmem [shape: f32[3,2,96], index: 0, kind: input, shape index: {}]
  %s1 = inlined_call_operand.vmem [shape: f32[3,96,32], index: 1, kind: input, shape index: {}]
  %s2 = inlined_call_operand.vmem [shape: f32[3,1,32], index: 2, kind: input, shape index: {}]
  %s3 = inlined_call_operand.vmem [shape: f32[3,32,128], index: 3, kind: input, shape index: {}]
  %s4 = inlined_call_operand.vmem [shape: f32[3,1,128], index: 4, kind: input, shape index: {}]
  %s5 = inlined_call_operand.vmem [shape: f32[3,2,128], index: 5, kind: output, shape index: {0}]
  %s6 = inlined_call_operand.hbm [shape: f32[3,2,32], index: 6, kind: output, shape index: {1}]
  %7 = xla_tuple %s5, %s6
  %s8 = sld [smem:[#allocation0]]
  $region38: #{rnn_forward.1} parent=0
    _
  %s10 = ssub.s32 1, %s8
  %s11 = scalar_select 0, %s10, %s8
  $region1: #{rnn_forward.1} parent=0
    #allocation2 [shape = 'u8[3072]{0}', space=vmem, size = 0xc00, scoped, tag = 'output window, operand 1, single buffered']
    #allocation3 [shape = 's32[1]{0}', space=sflag, size = 0x4, scoped, tag = 'scoped memory for rnn_forward.1']
    %12 = vsyncpa [#allocation3], 0
    // Predicated region
    $region2: #{rnn_forward.1} parent=1 // pred_check
      _
    $region3: #{rnn_forward.1} parent=1 // pred_check_branch
      %14 = sbr.rel (0) target = $region5
    $region4: #{rnn_forward.1} parent=1 // pred_region
      _
    $region5: #{rnn_forward.1} parent=1 // pred_fallthru
      _
    // Predicated region
    $region6: #{rnn_forward.1} parent=1 // pred_check
      _
    $region7: #{rnn_forward.1} parent=1 // pred_check_branch
      %16 = sbr.rel (0) target = $region9
    $region8: #{rnn_forward.1} parent=1 // pred_region
      _
    $region9: #{rnn_forward.1} parent=1 // pred_fallthru
      _
    // Predicated region
    $region10: #{rnn_forward.1} parent=1 // pred_check
      _
    $region11: #{rnn_forward.1} parent=1 // pred_check_branch
      %18 = sbr.rel (0) target = $region13
    $region12: #{rnn_forward.1} parent=1 // pred_region
      _
    $region13: #{rnn_forward.1} parent=1 // pred_fallthru
      _
    // Predicated region
    $region14: #{rnn_forward.1} parent=1 // pred_check
      _
    $region15: #{rnn_forward.1} parent=1 // pred_check_branch
      %20 = sbr.rel (0) target = $region17
    $region16: #{rnn_forward.1} parent=1 // pred_region
      _
    $region17: #{rnn_forward.1} parent=1 // pred_fallthru
      _
    // Predicated region
    $region18: #{rnn_forward.1} parent=1 // pred_check
      _
    $region19: #{rnn_forward.1} parent=1 // pred_check_branch
      %22 = sbr.rel (0) target = $region21
    $region20: #{rnn_forward.1} parent=1 // pred_region
      _
    $region21: #{rnn_forward.1} parent=1 // pred_fallthru
      _
    %v23 = vld [vmem:[%s0] sm:$0x3]
    %v24 = vld [vmem:[%s0 + $0x2] sm:$0x3]
    %v25 = vld [vmem:[%s0 + $0x4] sm:$0x3]
    %v26 = vld [vmem:[%s1] sm:$0xff]
    %v27 = vld [vmem:[%s1 + $0x8] sm:$0xff]
    %v28 = vld [vmem:[%s1 + $0x10] sm:$0xff]
    %v29 = vld [vmem:[%s1 + $0x18] sm:$0xff]
    %v30 = vld [vmem:[%s1 + $0x20] sm:$0xff]
    %v31 = vld [vmem:[%s1 + $0x28] sm:$0xff]
    %v32 = vld [vmem:[%s1 + $0x30] sm:$0xff]
    %v33 = vld [vmem:[%s1 + $0x38] sm:$0xff]
    %v34 = vld [vmem:[%s1 + $0x40] sm:$0xff]
    %v35 = vld [vmem:[%s1 + $0x48] sm:$0xff]
    %v36 = vld [vmem:[%s1 + $0x50] sm:$0xff]
    %v37 = vld [vmem:[%s1 + $0x58] sm:$0xff]
    %v38 = vld [vmem:[%s1 + $0x60] sm:$0xff]
    %v39 = vld [vmem:[%s1 + $0x68] sm:$0xff]
    %v40 = vld [vmem:[%s1 + $0x70] sm:$0xff]
    %v41 = vld [vmem:[%s1 + $0x78] sm:$0xff]
    %v42 = vld [vmem:[%s1 + $0x80] sm:$0xff]
    %v43 = vld [vmem:[%s1 + $0x88] sm:$0xff]
    %v44 = vld [vmem:[%s1 + $0x90] sm:$0xff]
    %v45 = vld [vmem:[%s1 + $0x98] sm:$0xff]
    %v46 = vld [vmem:[%s1 + $0xa0] sm:$0xff]
    %v47 = vld [vmem:[%s1 + $0xa8] sm:$0xff]
    %v48 = vld [vmem:[%s1 + $0xb0] sm:$0xff]
    %v49 = vld [vmem:[%s1 + $0xb8] sm:$0xff]
    %v50 = vld [vmem:[%s1 + $0xc0] sm:$0xff]
    %v51 = vld [vmem:[%s1 + $0xc8] sm:$0xff]
    %v52 = vld [vmem:[%s1 + $0xd0] sm:$0xff]
    %v53 = vld [vmem:[%s1 + $0xd8] sm:$0xff]
    %v54 = vld [vmem:[%s1 + $0xe0] sm:$0xff]
    %v55 = vld [vmem:[%s1 + $0xe8] sm:$0xff]
    %v56 = vld [vmem:[%s1 + $0xf0] sm:$0xff]
    %v57 = vld [vmem:[%s1 + $0xf8] sm:$0xff]
    %v58 = vld [vmem:[%s1 + $0x100] sm:$0xff]
    %v59 = vld [vmem:[%s1 + $0x108] sm:$0xff]
    %v60 = vld [vmem:[%s1 + $0x110] sm:$0xff]
    %v61 = vld [vmem:[%s1 + $0x118] sm:$0xff]
    %v62 = vld [vmem:[%s2] sm:$0x1]
    %v63 = vld [vmem:[%s2 + $0x1] sm:$0x1]
    %v64 = vld [vmem:[%s2 + $0x2] sm:$0x1]
    %v68 = vlaneseq
    %v69 = vshrl.u32 %v68, 7
    %v70 = vsub.s32 0, %v69
    %v71 = vrot.slane %v62, %v70
    %v72 = vlaneseq
    %v73 = vshrl.u32 %v72, 7
    %v74 = vsub.s32 0, %v73
    %v75 = vrot.slane %v63, %v74
    %v76 = vlaneseq
    %v77 = vshrl.u32 %v76, 7
    %v78 = vsub.s32 0, %v77
    %v79 = vrot.slane %v64, %v78
    %vm83 = vcmask 785408
    %v85 = vsel %vm83, %v23, 0
    %87 = vmatprep.subr.mxu0 0.0
    %88 = vmatpush1.msra.mxu0 %v26
    %89 = vmatprep.subr.mxu0 0.0
    %90 = vmatpush1.msra.mxu0 %v27
    %91 = vmatprep.subr.mxu0 0.0
    %92 = vmatpush1.msra.mxu0 %v28
    %93 = vmatprep.subr.mxu0 0.0
    %94 = vmatpush1.msra.mxu0 %v29
    %95 = vmatprep.subr.mxu0 0.0
    %96 = vmatpush1.msra.mxu0 %v30
    %97 = vmatprep.subr.mxu0 0.0
    %98 = vmatpush1.msra.mxu0 %v31
    %99 = vmatprep.subr.mxu0 0.0
    %100 = vmatpush1.msra.mxu0 %v32
    %101 = vmatprep.subr.mxu0 0.0
    %102 = vmatpush1.msra.mxu0 %v33
    %103 = vmatprep.subr.mxu0 0.0
    %104 = vmatpush1.msra.mxu0 %v34
    %105 = vmatprep.subr.mxu0 0.0
    %106 = vmatpush1.msra.mxu0 %v35
    %107 = vmatprep.subr.mxu0 0.0
    %108 = vmatpush1.msra.mxu0 %v36
    %109 = vmatprep.subr.mxu0 0.0
    %110 = vmatpush1.msra.mxu0 %v37
    %111 = vmatprep.subr.mxu0 0.0
    %112 = vmatpush1.msra.mxu0 0.0
    %113 = vmatprep.subr.mxu0 0.0
    %114 = vmatpush1.msra.mxu0 0.0
    %115 = vmatprep.subr.mxu0 0.0
    %116 = vmatpush1.msra.mxu0 0.0
    %117 = vmatprep.subr.mxu0 0.0
    %118 = vmatpush1.msra.mxu0 0.0
    %119 = vmatprep.subr.mxu0 0.0
    %120 = vmatpush1.msra.mxu0 0.0
    %121 = vmatprep.subr.mxu0 0.0
    %122 = vmatpush1.msra.mxu0 0.0
    %123 = vmatprep.subr.mxu0 0.0
    %124 = vmatpush1.msra.mxu0 0.0
    %125 = vmatprep.subr.mxu0 0.0
    %126 = vmatpush1.msra.mxu0 0.0
    %127 = vmatprep.subr.mxu0 0.0
    %128 = vmatpush1.msra.mxu0 0.0
    %129 = vmatprep.subr.mxu0 0.0
    %130 = vmatpush1.msra.mxu0 0.0
    %131 = vmatprep.subr.mxu0 0.0
    %132 = vmatpush1.msra.mxu0 0.0
    %133 = vmatprep.subr.mxu0 0.0
    %134 = vmatpush1.msra.mxu0 0.0
    %135 = vmatprep.subr.mxu0 0.0
    %136 = vmatpush1.msra.mxu0 0.0
    %137 = vmatprep.subr.mxu0 0.0
    %138 = vmatpush1.msra.mxu0 0.0
    %139 = vmatprep.subr.mxu0 0.0
    %140 = vmatpush1.msra.mxu0 0.0
    %141 = vmatprep.subr.mxu0 0.0
    %142 = vmatpush1.msra.mxu0 0.0
    %143 = vmatprep.subr.mxu0 0.0
    %144 = vmatpush1.msra.mxu0 0.0
    %145 = vmatprep.subr.mxu0 0.0
    %146 = vmatpush1.msra.mxu0 0.0
    %147 = vmatprep.subr.mxu0 0.0
    %148 = vmatpush1.msra.mxu0 0.0
    %149 = vmatprep.subr.mxu0 0.0
    %150 = vmatpush1.msra.mxu0 0.0
    %151 = vmatprep.mubr.f32.mxu0 0.0
    %152 = vmatmul.mubr.f32.gmra.mrb[0].mxu0 %v85
    %v153 = vpop.f32.mrb[0].mxu0
    %v154 = vadd.f32 %v71, %v153
    %v155 = vpop.f32.mrb[0].mxu0
    %156 = vdwg.mxu0
    %v158 = vsel %vm83, %v24, 0
    %160 = vmatprep.subr.mxu0 0.0
    %161 = vmatpush1.msra.mxu0 %v38
    %162 = vmatprep.subr.mxu0 0.0
    %163 = vmatpush1.msra.mxu0 %v39
    %164 = vmatprep.subr.mxu0 0.0
    %165 = vmatpush1.msra.mxu0 %v40
    %166 = vmatprep.subr.mxu0 0.0
    %167 = vmatpush1.msra.mxu0 %v41
    %168 = vmatprep.subr.mxu0 0.0
    %169 = vmatpush1.msra.mxu0 %v42
    %170 = vmatprep.subr.mxu0 0.0
    %171 = vmatpush1.msra.mxu0 %v43
    %172 = vmatprep.subr.mxu0 0.0
    %173 = vmatpush1.msra.mxu0 %v44
    %174 = vmatprep.subr.mxu0 0.0
    %175 = vmatpush1.msra.mxu0 %v45
    %176 = vmatprep.subr.mxu0 0.0
    %177 = vmatpush1.msra.mxu0 %v46
    %178 = vmatprep.subr.mxu0 0.0
    %179 = vmatpush1.msra.mxu0 %v47
    %180 = vmatprep.subr.mxu0 0.0
    %181 = vmatpush1.msra.mxu0 %v48
    %182 = vmatprep.subr.mxu0 0.0
    %183 = vmatpush1.msra.mxu0 %v49
    %184 = vmatprep.subr.mxu0 0.0
    %185 = vmatpush1.msra.mxu0 0.0
    %186 = vmatprep.subr.mxu0 0.0
    %187 = vmatpush1.msra.mxu0 0.0
    %188 = vmatprep.subr.mxu0 0.0
    %189 = vmatpush1.msra.mxu0 0.0
    %190 = vmatprep.subr.mxu0 0.0
    %191 = vmatpush1.msra.mxu0 0.0
    %192 = vmatprep.subr.mxu0 0.0
    %193 = vmatpush1.msra.mxu0 0.0
    %194 = vmatprep.subr.mxu0 0.0
    %195 = vmatpush1.msra.mxu0 0.0
    %196 = vmatprep.subr.mxu0 0.0
    %197 = vmatpush1.msra.mxu0 0.0
    %198 = vmatprep.subr.mxu0 0.0
    %199 = vmatpush1.msra.mxu0 0.0
    %200 = vmatprep.subr.mxu0 0.0
    %201 = vmatpush1.msra.mxu0 0.0
    %202 = vmatprep.subr.mxu0 0.0
    %203 = vmatpush1.msra.mxu0 0.0
    %204 = vmatprep.subr.mxu0 0.0
    %205 = vmatpush1.msra.mxu0 0.0
    %206 = vmatprep.subr.mxu0 0.0
    %207 = vmatpush1.msra.mxu0 0.0
    %208 = vmatprep.subr.mxu0 0.0
    %209 = vmatpush1.msra.mxu0 0.0
    %210 = vmatprep.subr.mxu0 0.0
    %211 = vmatpush1.msra.mxu0 0.0
    %212 = vmatprep.subr.mxu0 0.0
    %213 = vmatpush1.msra.mxu0 0.0
    %214 = vmatprep.subr.mxu0 0.0
    %215 = vmatpush1.msra.mxu0 0.0
    %216 = vmatprep.subr.mxu0 0.0
    %217 = vmatpush1.msra.mxu0 0.0
    %218 = vmatprep.subr.mxu0 0.0
    %219 = vmatpush1.msra.mxu0 0.0
    %220 = vmatprep.subr.mxu0 0.0
    %221 = vmatpush1.msra.mxu0 0.0
    %222 = vmatprep.subr.mxu0 0.0
    %223 = vmatpush1.msra.mxu0 0.0
    %224 = vmatprep.mubr.f32.mxu0 0.0
    %225 = vmatmul.mubr.f32.gmra.mrb[0].mxu0 %v158
    %v226 = vpop.f32.mrb[0].mxu0
    %v227 = vadd.f32 %v75, %v226
    %v228 = vpop.f32.mrb[0].mxu0
    %229 = vdwg.mxu0
    %v231 = vsel %vm83, %v25, 0
    %233 = vmatprep.subr.mxu0 0.0
    %234 = vmatpush1.msra.mxu0 %v50
    %235 = vmatprep.subr.mxu0 0.0
    %236 = vmatpush1.msra.mxu0 %v51
    %237 = vmatprep.subr.mxu0 0.0
    %238 = vmatpush1.msra.mxu0 %v52
    %239 = vmatprep.subr.mxu0 0.0
    %240 = vmatpush1.msra.mxu0 %v53
    %241 = vmatprep.subr.mxu0 0.0
    %242 = vmatpush1.msra.mxu0 %v54
    %243 = vmatprep.subr.mxu0 0.0
    %244 = vmatpush1.msra.mxu0 %v55
    %245 = vmatprep.subr.mxu0 0.0
    %246 = vmatpush1.msra.mxu0 %v56
    %247 = vmatprep.subr.mxu0 0.0
    %248 = vmatpush1.msra.mxu0 %v57
    %249 = vmatprep.subr.mxu0 0.0
    %250 = vmatpush1.msra.mxu0 %v58
    %251 = vmatprep.subr.mxu0 0.0
    %252 = vmatpush1.msra.mxu0 %v59
    %253 = vmatprep.subr.mxu0 0.0
    %254 = vmatpush1.msra.mxu0 %v60
    %255 = vmatprep.subr.mxu0 0.0
    %256 = vmatpush1.msra.mxu0 %v61
    %257 = vmatprep.subr.mxu0 0.0
    %258 = vmatpush1.msra.mxu0 0.0
    %259 = vmatprep.subr.mxu0 0.0
    %260 = vmatpush1.msra.mxu0 0.0
    %261 = vmatprep.subr.mxu0 0.0
    %262 = vmatpush1.msra.mxu0 0.0
    %263 = vmatprep.subr.mxu0 0.0
    %264 = vmatpush1.msra.mxu0 0.0
    %265 = vmatprep.subr.mxu0 0.0
    %266 = vmatpush1.msra.mxu0 0.0
    %267 = vmatprep.subr.mxu0 0.0
    %268 = vmatpush1.msra.mxu0 0.0
    %269 = vmatprep.subr.mxu0 0.0
    %270 = vmatpush1.msra.mxu0 0.0
    %271 = vmatprep.subr.mxu0 0.0
    %272 = vmatpush1.msra.mxu0 0.0
    %273 = vmatprep.subr.mxu0 0.0
    %274 = vmatpush1.msra.mxu0 0.0
    %275 = vmatprep.subr.mxu0 0.0
    %276 = vmatpush1.msra.mxu0 0.0
    %277 = vmatprep.subr.mxu0 0.0
    %278 = vmatpush1.msra.mxu0 0.0
    %279 = vmatprep.subr.mxu0 0.0
    %280 = vmatpush1.msra.mxu0 0.0
    %281 = vmatprep.subr.mxu0 0.0
    %282 = vmatpush1.msra.mxu0 0.0
    %283 = vmatprep.subr.mxu0 0.0
    %284 = vmatpush1.msra.mxu0 0.0
    %285 = vmatprep.subr.mxu0 0.0
    %286 = vmatpush1.msra.mxu0 0.0
    %287 = vmatprep.subr.mxu0 0.0
    %288 = vmatpush1.msra.mxu0 0.0
    %289 = vmatprep.subr.mxu0 0.0
    %290 = vmatpush1.msra.mxu0 0.0
    %291 = vmatprep.subr.mxu0 0.0
    %292 = vmatpush1.msra.mxu0 0.0
    %293 = vmatprep.subr.mxu0 0.0
    %294 = vmatpush1.msra.mxu0 0.0
    %295 = vmatprep.subr.mxu0 0.0
    %296 = vmatpush1.msra.mxu0 0.0
    %297 = vmatprep.mubr.f32.mxu0 0.0
    %298 = vmatmul.mubr.f32.gmra.mrb[0].mxu0 %v231
    %v299 = vpop.f32.mrb[0].mxu0
    %v300 = vadd.f32 %v79, %v299
    %v301 = vpop.f32.mrb[0].mxu0
    %302 = vdwg.mxu0
    %v303 = vtanh.pop %v154
    %v304 = vtanh.pop %v227
    %v305 = vtanh.pop %v300
    %vm306 = vcmask 254976
    %307 = vst.msk [vmem:[#allocation2] sm:$0x3] %vm306, %v303
    %308 = vst.msk [vmem:[#allocation2 + $0x2] sm:$0x3] %vm306, %v304
    %309 = vst.msk [vmem:[#allocation2 + $0x4] sm:$0x3] %vm306, %v305
    %v310 = vld [vmem:[%s3] sm:$0xff]
    %v311 = vld [vmem:[%s3 + $0x8] sm:$0xff]
    %v312 = vld [vmem:[%s3 + $0x10] sm:$0xff]
    %v313 = vld [vmem:[%s3 + $0x18] sm:$0xff]
    %v314 = vld [vmem:[%s3 + $0x20] sm:$0xff]
    %v315 = vld [vmem:[%s3 + $0x28] sm:$0xff]
    %v316 = vld [vmem:[%s3 + $0x30] sm:$0xff]
    %v317 = vld [vmem:[%s3 + $0x38] sm:$0xff]
    %v318 = vld [vmem:[%s3 + $0x40] sm:$0xff]
    %v319 = vld [vmem:[%s3 + $0x48] sm:$0xff]
    %v320 = vld [vmem:[%s3 + $0x50] sm:$0xff]
    %v321 = vld [vmem:[%s3 + $0x58] sm:$0xff]
    %v322 = vld [vmem:[%s4] sm:$0x1]
    %v323 = vld [vmem:[%s4 + $0x1] sm:$0x1]
    %v324 = vld [vmem:[%s4 + $0x2] sm:$0x1]
    %v328 = vlaneseq
    %v329 = vshrl.u32 %v328, 7
    %v330 = vsub.s32 0, %v329
    %v331 = vrot.slane %v322, %v330
    %v332 = vlaneseq
    %v333 = vshrl.u32 %v332, 7
    %v334 = vsub.s32 0, %v333
    %v335 = vrot.slane %v323, %v334
    %v336 = vlaneseq
    %v337 = vshrl.u32 %v336, 7
    %v338 = vsub.s32 0, %v337
    %v339 = vrot.slane %v324, %v338
    %vm343 = vcmask 261120
    %v345 = vsel %vm343, %v303, 0
    %347 = vmatprep.subr.mxu0 0.0
    %348 = vmatpush1.msra.mxu0 %v310
    %349 = vmatprep.subr.mxu0 0.0
    %350 = vmatpush1.msra.mxu0 %v311
    %351 = vmatprep.subr.mxu0 0.0
    %352 = vmatpush1.msra.mxu0 %v312
    %353 = vmatprep.subr.mxu0 0.0
    %354 = vmatpush1.msra.mxu0 %v313
    %355 = vmatprep.subr.mxu0 0.0
    %356 = vmatpush1.msra.mxu0 0.0
    %357 = vmatprep.subr.mxu0 0.0
    %358 = vmatpush1.msra.mxu0 0.0
    %359 = vmatprep.subr.mxu0 0.0
    %360 = vmatpush1.msra.mxu0 0.0
    %361 = vmatprep.subr.mxu0 0.0
    %362 = vmatpush1.msra.mxu0 0.0
    %363 = vmatprep.subr.mxu0 0.0
    %364 = vmatpush1.msra.mxu0 0.0
    %365 = vmatprep.subr.mxu0 0.0
    %366 = vmatpush1.msra.mxu0 0.0
    %367 = vmatprep.subr.mxu0 0.0
    %368 = vmatpush1.msra.mxu0 0.0
    %369 = vmatprep.subr.mxu0 0.0
    %370 = vmatpush1.msra.mxu0 0.0
    %371 = vmatprep.subr.mxu0 0.0
    %372 = vmatpush1.msra.mxu0 0.0
    %373 = vmatprep.subr.mxu0 0.0
    %374 = vmatpush1.msra.mxu0 0.0
    %375 = vmatprep.subr.mxu0 0.0
    %376 = vmatpush1.msra.mxu0 0.0
    %377 = vmatprep.subr.mxu0 0.0
    %378 = vmatpush1.msra.mxu0 0.0
    %379 = vmatprep.subr.mxu0 0.0
    %380 = vmatpush1.msra.mxu0 0.0
    %381 = vmatprep.subr.mxu0 0.0
    %382 = vmatpush1.msra.mxu0 0.0
    %383 = vmatprep.subr.mxu0 0.0
    %384 = vmatpush1.msra.mxu0 0.0
    %385 = vmatprep.subr.mxu0 0.0
    %386 = vmatpush1.msra.mxu0 0.0
    %387 = vmatprep.subr.mxu0 0.0
    %388 = vmatpush1.msra.mxu0 0.0
    %389 = vmatprep.subr.mxu0 0.0
    %390 = vmatpush1.msra.mxu0 0.0
    %391 = vmatprep.subr.mxu0 0.0
    %392 = vmatpush1.msra.mxu0 0.0
    %393 = vmatprep.subr.mxu0 0.0
    %394 = vmatpush1.msra.mxu0 0.0
    %395 = vmatprep.subr.mxu0 0.0
    %396 = vmatpush1.msra.mxu0 0.0
    %397 = vmatprep.subr.mxu0 0.0
    %398 = vmatpush1.msra.mxu0 0.0
    %399 = vmatprep.subr.mxu0 0.0
    %400 = vmatpush1.msra.mxu0 0.0
    %401 = vmatprep.subr.mxu0 0.0
    %402 = vmatpush1.msra.mxu0 0.0
    %403 = vmatprep.subr.mxu0 0.0
    %404 = vmatpush1.msra.mxu0 0.0
    %405 = vmatprep.subr.mxu0 0.0
    %406 = vmatpush1.msra.mxu0 0.0
    %407 = vmatprep.subr.mxu0 0.0
    %408 = vmatpush1.msra.mxu0 0.0
    %409 = vmatprep.subr.mxu0 0.0
    %410 = vmatpush1.msra.mxu0 0.0
    %411 = vmatprep.mubr.f32.mxu0 0.0
    %412 = vmatmul.mubr.f32.gmra.mrb[0].mxu0 %v345
    %v413 = vpop.f32.mrb[0].mxu0
    %v414 = vadd.f32 %v331, %v413
    %v415 = vpop.f32.mrb[0].mxu0
    %416 = vdwg.mxu0
    %v418 = vsel %vm343, %v304, 0
    %420 = vmatprep.subr.mxu0 0.0
    %421 = vmatpush1.msra.mxu0 %v314
    %422 = vmatprep.subr.mxu0 0.0
    %423 = vmatpush1.msra.mxu0 %v315
    %424 = vmatprep.subr.mxu0 0.0
    %425 = vmatpush1.msra.mxu0 %v316
    %426 = vmatprep.subr.mxu0 0.0
    %427 = vmatpush1.msra.mxu0 %v317
    %428 = vmatprep.subr.mxu0 0.0
    %429 = vmatpush1.msra.mxu0 0.0
    %430 = vmatprep.subr.mxu0 0.0
    %431 = vmatpush1.msra.mxu0 0.0
    %432 = vmatprep.subr.mxu0 0.0
    %433 = vmatpush1.msra.mxu0 0.0
    %434 = vmatprep.subr.mxu0 0.0
    %435 = vmatpush1.msra.mxu0 0.0
    %436 = vmatprep.subr.mxu0 0.0
    %437 = vmatpush1.msra.mxu0 0.0
    %438 = vmatprep.subr.mxu0 0.0
    %439 = vmatpush1.msra.mxu0 0.0
    %440 = vmatprep.subr.mxu0 0.0
    %441 = vmatpush1.msra.mxu0 0.0
    %442 = vmatprep.subr.mxu0 0.0
    %443 = vmatpush1.msra.mxu0 0.0
    %444 = vmatprep.subr.mxu0 0.0
    %445 = vmatpush1.msra.mxu0 0.0
    %446 = vmatprep.subr.mxu0 0.0
    %447 = vmatpush1.msra.mxu0 0.0
    %448 = vmatprep.subr.mxu0 0.0
    %449 = vmatpush1.msra.mxu0 0.0
    %450 = vmatprep.subr.mxu0 0.0
    %451 = vmatpush1.msra.mxu0 0.0
    %452 = vmatprep.subr.mxu0 0.0
    %453 = vmatpush1.msra.mxu0 0.0
    %454 = vmatprep.subr.mxu0 0.0
    %455 = vmatpush1.msra.mxu0 0.0
    %456 = vmatprep.subr.mxu0 0.0
    %457 = vmatpush1.msra.mxu0 0.0
    %458 = vmatprep.subr.mxu0 0.0
    %459 = vmatpush1.msra.mxu0 0.0
    %460 = vmatprep.subr.mxu0 0.0
    %461 = vmatpush1.msra.mxu0 0.0
    %462 = vmatprep.subr.mxu0 0.0
    %463 = vmatpush1.msra.mxu0 0.0
    %464 = vmatprep.subr.mxu0 0.0
    %465 = vmatpush1.msra.mxu0 0.0
    %466 = vmatprep.subr.mxu0 0.0
    %467 = vmatpush1.msra.mxu0 0.0
    %468 = vmatprep.subr.mxu0 0.0
    %469 = vmatpush1.msra.mxu0 0.0
    %470 = vmatprep.subr.mxu0 0.0
    %471 = vmatpush1.msra.mxu0 0.0
    %472 = vmatprep.subr.mxu0 0.0
    %473 = vmatpush1.msra.mxu0 0.0
    %474 = vmatprep.subr.mxu0 0.0
    %475 = vmatpush1.msra.mxu0 0.0
    %476 = vmatprep.subr.mxu0 0.0
    %477 = vmatpush1.msra.mxu0 0.0
    %478 = vmatprep.subr.mxu0 0.0
    %479 = vmatpush1.msra.mxu0 0.0
    %480 = vmatprep.subr.mxu0 0.0
    %481 = vmatpush1.msra.mxu0 0.0
    %482 = vmatprep.subr.mxu0 0.0
    %483 = vmatpush1.msra.mxu0 0.0
    %484 = vmatprep.mubr.f32.mxu0 0.0
    %485 = vmatmul.mubr.f32.gmra.mrb[0].mxu0 %v418
    %v486 = vpop.f32.mrb[0].mxu0
    %v487 = vadd.f32 %v335, %v486
    %v488 = vpop.f32.mrb[0].mxu0
    %489 = vdwg.mxu0
    %v491 = vsel %vm343, %v305, 0
    %493 = vmatprep.subr.mxu0 0.0
    %494 = vmatpush1.msra.mxu0 %v318
    %495 = vmatprep.subr.mxu0 0.0
    %496 = vmatpush1.msra.mxu0 %v319
    %497 = vmatprep.subr.mxu0 0.0
    %498 = vmatpush1.msra.mxu0 %v320
    %499 = vmatprep.subr.mxu0 0.0
    %500 = vmatpush1.msra.mxu0 %v321
    %501 = vmatprep.subr.mxu0 0.0
    %502 = vmatpush1.msra.mxu0 0.0
    %503 = vmatprep.subr.mxu0 0.0
    %504 = vmatpush1.msra.mxu0 0.0
    %505 = vmatprep.subr.mxu0 0.0
    %506 = vmatpush1.msra.mxu0 0.0
    %507 = vmatprep.subr.mxu0 0.0
    %508 = vmatpush1.msra.mxu0 0.0
    %509 = vmatprep.subr.mxu0 0.0
    %510 = vmatpush1.msra.mxu0 0.0
    %511 = vmatprep.subr.mxu0 0.0
    %512 = vmatpush1.msra.mxu0 0.0
    %513 = vmatprep.subr.mxu0 0.0
    %514 = vmatpush1.msra.mxu0 0.0
    %515 = vmatprep.subr.mxu0 0.0
    %516 = vmatpush1.msra.mxu0 0.0
    %517 = vmatprep.subr.mxu0 0.0
    %518 = vmatpush1.msra.mxu0 0.0
    %519 = vmatprep.subr.mxu0 0.0
    %520 = vmatpush1.msra.mxu0 0.0
    %521 = vmatprep.subr.mxu0 0.0
    %522 = vmatpush1.msra.mxu0 0.0
    %523 = vmatprep.subr.mxu0 0.0
    %524 = vmatpush1.msra.mxu0 0.0
    %525 = vmatprep.subr.mxu0 0.0
    %526 = vmatpush1.msra.mxu0 0.0
    %527 = vmatprep.subr.mxu0 0.0
    %528 = vmatpush1.msra.mxu0 0.0
    %529 = vmatprep.subr.mxu0 0.0
    %530 = vmatpush1.msra.mxu0 0.0
    %531 = vmatprep.subr.mxu0 0.0
    %532 = vmatpush1.msra.mxu0 0.0
    %533 = vmatprep.subr.mxu0 0.0
    %534 = vmatpush1.msra.mxu0 0.0
    %535 = vmatprep.subr.mxu0 0.0
    %536 = vmatpush1.msra.mxu0 0.0
    %537 = vmatprep.subr.mxu0 0.0
    %538 = vmatpush1.msra.mxu0 0.0
    %539 = vmatprep.subr.mxu0 0.0
    %540 = vmatpush1.msra.mxu0 0.0
    %541 = vmatprep.subr.mxu0 0.0
    %542 = vmatpush1.msra.mxu0 0.0
    %543 = vmatprep.subr.mxu0 0.0
    %544 = vmatpush1.msra.mxu0 0.0
    %545 = vmatprep.subr.mxu0 0.0
    %546 = vmatpush1.msra.mxu0 0.0
    %547 = vmatprep.subr.mxu0 0.0
    %548 = vmatpush1.msra.mxu0 0.0
    %549 = vmatprep.subr.mxu0 0.0
    %550 = vmatpush1.msra.mxu0 0.0
    %551 = vmatprep.subr.mxu0 0.0
    %552 = vmatpush1.msra.mxu0 0.0
    %553 = vmatprep.subr.mxu0 0.0
    %554 = vmatpush1.msra.mxu0 0.0
    %555 = vmatprep.subr.mxu0 0.0
    %556 = vmatpush1.msra.mxu0 0.0
    %557 = vmatprep.mubr.f32.mxu0 0.0
    %558 = vmatmul.mubr.f32.gmra.mrb[0].mxu0 %v491
    %v559 = vpop.f32.mrb[0].mxu0
    %v560 = vadd.f32 %v339, %v559
    %v561 = vpop.f32.mrb[0].mxu0
    %562 = vdwg.mxu0
    %563 = vst [vmem:[%s5] sm:$0x3] %v414
    %564 = vst [vmem:[%s5 + $0x2] sm:$0x3] %v487
    %565 = vst [vmem:[%s5 + $0x4] sm:$0x3] %v560
    // Predicated region
    $region22: #{rnn_forward.1} parent=1 // pred_check
      _
    $region23: #{rnn_forward.1} parent=1 // pred_check_branch
      %567 = sbr.rel (0) target = $region25
    $region24: #{rnn_forward.1} parent=1 // pred_region
      _
    $region25: #{rnn_forward.1} parent=1 // pred_fallthru
      _
    // Predicated region
    $region26: #{rnn_forward.1} parent=1 // pred_check
      _
    $region27: #{rnn_forward.1} parent=1 // pred_check_branch
      %569 = sbr.rel (0) target = $region29
    $region28: #{rnn_forward.1} parent=1 // pred_region
      %s571 = ssub.s32 96, 96
      %572 = vsyncadd [#allocation3], %s571
      %s573 = sshll.u32 [#allocation2], 4
      %s574 = int_to_ptr.vmem [resolvable:$true] %s573
      %579 = dma.vmem_to_hbm [thread:$0]  %s574, 96, %s6, [#allocation3], 32, 32, 2
    $region29: #{rnn_forward.1} parent=1 // pred_fallthru
      _
    // Predicated region
    $region30: #{rnn_forward.1} parent=1 // pred_check
      _
    $region31: #{rnn_forward.1} parent=1 // pred_check_branch
      %581 = sbr.rel (0) target = $region33
    $region32: #{rnn_forward.1} parent=1 // pred_region
      _
    $region33: #{rnn_forward.1} parent=1 // pred_fallthru
      _
    // Predicated region
    $region34: #{rnn_forward.1} parent=1 // pred_check
      _
    $region35: #{rnn_forward.1} parent=1 // pred_check_branch
      %583 = sbr.rel (0) target = $region37
    $region36: #{rnn_forward.1} parent=1 // pred_region
      %584 = dma.done [#allocation3], 96
    $region37: #{rnn_forward.1} parent=1 // pred_fallthru
      _
    %585 = vsyncpa [#allocation3], 1

</llo_original>
